<compile_context>
chip_gen: v7x
topology: tpu7x:2x2x1
jax: 0.10.0
libtpu: 0.0.40
codegen_flags: <defaults>
</compile_context>

<pallas_src>
import functools

import jax
import jax.numpy as jnp
from jax import lax
from jax.experimental import pallas as pl
from jax.experimental.pallas import tpu as pltpu

EPS = 1e-5  # nn.BatchNorm2d default


def _initial_block_kernel(patch_ref, w_ref, scale_ref, bias_ref, alpha_ref,
                          out_ref, *, cin, cconv):
    # patch_ref: (1, 9*Cin, TP) bf16, row order (kh, kw, cin); spatial on lanes.
    patches = patch_ref[0]

    # Conv2d(3x3, stride 2, pad 1, bias=False) as a single MXU matmul.
    conv = jnp.dot(w_ref[...], patches,
                   preferred_element_type=jnp.float32)          # (Cconv, TP) f32

    # MaxPool2d(2, 2): the 2x2 pool window of output pixel (i, j) is exactly
    # the im2col columns at kernel offsets (kh, kw) in {1,2}x{1,2}, i.e. row
    # bands k*Cin .. (k+1)*Cin for k in {4, 5, 7, 8}.  Max in bf16 (exact),
    # then widen once for the BN math.
    p00 = patches[4 * cin:5 * cin, :]
    p01 = patches[5 * cin:6 * cin, :]
    p10 = patches[7 * cin:8 * cin, :]
    p11 = patches[8 * cin:9 * cin, :]
    pool = jnp.maximum(jnp.maximum(p00, p01),
                       jnp.maximum(p10, p11)).astype(jnp.float32)  # (Cin, TP)

    alpha = alpha_ref[0, 0]                                      # PReLU scalar (SMEM)

    # Folded BatchNorm (inference) + PReLU, written straight into the two
    # channel bands of the output tile (the torch.cat happens for free).
    yc = conv * scale_ref[:cconv, :] + bias_ref[:cconv, :]
    yc = jnp.where(yc >= 0.0, yc, alpha * yc)
    out_ref[0, :cconv, :] = yc.astype(out_ref.dtype)

    yp = pool * scale_ref[cconv:, :] + bias_ref[cconv:, :]
    yp = jnp.where(yp >= 0.0, yp, alpha * yp)
    out_ref[0, cconv:, :] = yp.astype(out_ref.dtype)


def _pick_spatial_tile(p, kf, cout, budget_bytes=16 << 20):
    # Largest lane-dense tile that (a) divides the 128-padded spatial extent
    # and (b) keeps the double-buffered patch + output tiles inside a modest
    # VMEM budget (bigger tiles amortize the ~0.35us per-grid-step overhead).
    per_lane_bytes = kf * 2 + cout * 4            # bf16 patches + f32 output
    for t in (4096, 2048, 1024, 512, 256, 128):
        if p % t == 0 and 2 * t * per_lane_bytes <= budget_bytes:
            return t
    return 128 if p % 128 == 0 else p


def initial_block_forward(x, conv_w, gamma, beta, run_mean, run_var, alpha):
    """x: (N, Cin, H, W) float32 NCHW.  Returns (N, Cout, H//2, W//2) float32."""
    N, Cin, H, W = x.shape
    assert H % 2 == 0 and W % 2 == 0, "even H/W required (conv & pool sizes match)"
    Cconv = conv_w.shape[0]
    Cout = Cconv + Cin
    Ho, Wo = H // 2, W // 2
    P = Ho * Wo
    KF = 9 * Cin

    # ---- wrapper glue: channel-major im2col (spatial on lanes), bf16 ----
    x_bf = x.astype(jnp.bfloat16)
    x_pad = jnp.pad(x_bf, ((0, 0), (0, 0), (1, 1), (1, 1)))
    cols = []
    for kh in range(3):
        for kw in range(3):
            cols.append(
                x_pad[:, :, kh:kh + 2 * Ho:2, kw:kw + 2 * Wo:2].reshape(N, Cin, P))
    patches = jnp.concatenate(cols, axis=1)                      # (N, 9*Cin, P)

    # Pad the spatial dim to a multiple of 128 lanes (padded columns are
    # computed and then sliced off; they never affect real outputs).
    Pp = P if P % 128 == 0 else P + ((-P) % 128)
    if Pp != P:
        patches = jnp.pad(patches, ((0, 0), (0, 0), (0, Pp - P)))
    TP = _pick_spatial_tile(Pp, KF, Cout)

    # conv weight (Cconv, Cin, 3, 3) -> (Cconv, 9*Cin), column order (kh, kw, cin)
    w_mat = jnp.transpose(conv_w, (0, 2, 3, 1)).reshape(Cconv, KF)
    w_mat = w_mat.astype(jnp.bfloat16)

    # Fold eval-mode BatchNorm into per-channel scale/bias (f32).
    scale = (gamma.astype(jnp.float32) *
             lax.rsqrt(run_var.astype(jnp.float32) + EPS))
    bias = beta.astype(jnp.float32) - run_mean.astype(jnp.float32) * scale
    scale2 = scale.reshape(Cout, 1)
    bias2 = bias.reshape(Cout, 1)
    alpha2 = alpha.reshape(1, 1).astype(jnp.float32)

    kernel = functools.partial(_initial_block_kernel, cin=Cin, cconv=Cconv)

    out = pl.pallas_call(
        kernel,
        out_shape=jax.ShapeDtypeStruct((N, Cout, Pp), jnp.float32),
        grid_spec=pltpu.PrefetchScalarGridSpec(
            num_scalar_prefetch=0,
            grid=(N, Pp // TP),
            in_specs=[
                pl.BlockSpec((1, KF, TP), lambda n, p: (n, 0, p)),
                pl.BlockSpec((Cconv, KF), lambda n, p: (0, 0)),
                pl.BlockSpec((Cout, 1), lambda n, p: (0, 0)),
                pl.BlockSpec((Cout, 1), lambda n, p: (0, 0)),
                pl.BlockSpec(memory_space=pltpu.MemorySpace.SMEM),
            ],
            out_specs=pl.BlockSpec((1, Cout, TP), lambda n, p: (n, 0, p)),
        ),
        compiler_params=pltpu.CompilerParams(
            dimension_semantics=("parallel", "parallel")),
    )(patches, w_mat, scale2, bias2, alpha2)

    out = out[:, :, :P].reshape(N, Cout, Ho, Wo)                 # already NCHW
    return out


if __name__ == "__main__":
    key = jax.random.PRNGKey(0)
    k1, k2, k3, k4, k5, k6 = jax.random.split(key, 6)

    N, Cin, H, W = 2, 4, 16, 16
    Cout = 16
    Cconv = Cout - Cin

    x = jax.random.normal(k1, (N, Cin, H, W), jnp.float32)
    conv_w = 0.1 * jax.random.normal(k2, (Cconv, Cin, 3, 3), jnp.float32)
    gamma = 1.0 + 0.1 * jax.random.normal(k3, (Cout,), jnp.float32)
    beta = 0.1 * jax.random.normal(k4, (Cout,), jnp.float32)
    run_mean = 0.1 * jax.random.normal(k5, (Cout,), jnp.float32)
    run_var = jax.random.uniform(k6, (Cout,), jnp.float32, minval=0.5, maxval=1.5)
    alpha = jnp.array([0.25], jnp.float32)  # nn.PReLU() default init

    out = initial_block_forward(x, conv_w, gamma, beta, run_mean, run_var, alpha)
    out = jax.block_until_ready(out)

    # Pure-JAX reference (same eval-mode BN semantics).  Inputs are rounded to
    # bf16 to match the kernel's bf16 input stream; both sides accumulate f32.
    xr = x.astype(jnp.bfloat16).astype(jnp.float32)
    wr = conv_w.astype(jnp.bfloat16).astype(jnp.float32)
    conv_ref = lax.conv_general_dilated(
        xr, wr, window_strides=(2, 2), padding=((1, 1), (1, 1)),
        dimension_numbers=("NCHW", "OIHW", "NCHW"),
        precision=lax.Precision.HIGHEST)
    pool_ref = xr.reshape(N, Cin, H // 2, 2, W // 2, 2).max(axis=(3, 5))
    cat = jnp.concatenate([conv_ref, pool_ref], axis=1)
    b = lambda v: v.reshape(1, Cout, 1, 1)
    bn = (cat - b(run_mean)) * b(gamma) / jnp.sqrt(b(run_var) + EPS) + b(beta)
    ref = jnp.where(bn >= 0, bn, alpha[0] * bn)

    assert out.shape == (N, Cout, H // 2, W // 2), out.shape
    err = float(jnp.abs(out - ref).max())
    assert jnp.allclose(out, ref, atol=2e-3, rtol=2e-3), f"max abs err {err}"
    print("KERNEL_OK")
</pallas_src>

<mosaic_0001>
module attributes {stable_mosaic.version = 11 : i64} {
  func.func @_initial_block_kernel(%arg0: i32, %arg1: i32, %arg2: memref<1x36x128xbf16, #tpu.memory_space<vmem>>, %arg3: memref<12x36xbf16, #tpu.memory_space<vmem>>, %arg4: memref<16x1xf32, #tpu.memory_space<vmem>>, %arg5: memref<16x1xf32, #tpu.memory_space<vmem>>, %arg6: memref<1x1xf32, #tpu.memory_space<smem>>, %arg7: memref<1x16x128xf32, #tpu.memory_space<vmem>>) attributes {dimension_semantics = [#tpu.dimension_semantics<parallel>, #tpu.dimension_semantics<parallel>], iteration_bounds = array<i64: 2, 1>, scalar_prefetch = 0 : i64, scratch_operands = 0 : i64, tpu.core_type = #tpu.core_type<tc>, window_params = [{transform_indices = @transform_0, window_bounds = array<i64: 1, 36, 128>}, {pipeline_mode = #tpu.pipeline_mode<synchronous>, transform_indices = @transform_1, window_bounds = array<i64: 12, 36>}, {pipeline_mode = #tpu.pipeline_mode<synchronous>, transform_indices = @transform_2, window_bounds = array<i64: 16, 1>}, {pipeline_mode = #tpu.pipeline_mode<synchronous>, transform_indices = @transform_3, window_bounds = array<i64: 16, 1>}, {transform_indices = @transform_4, window_bounds = array<i64: 1, 1>}, {transform_indices = @transform_5, window_bounds = array<i64: 1, 16, 128>}]} {
    %c0 = arith.constant 0 : index
    %c0_0 = arith.constant 0 : index
    %c0_1 = arith.constant 0 : index
    %0 = vector.load %arg2[%c0, %c0_0, %c0_1] : memref<1x36x128xbf16, #tpu.memory_space<vmem>>, vector<1x36x128xbf16>
    %1 = vector.shape_cast %0 : vector<1x36x128xbf16> to vector<36x128xbf16>
    %c0_2 = arith.constant 0 : index
    %c0_3 = arith.constant 0 : index
    %2 = vector.load %arg3[%c0_2, %c0_3] : memref<12x36xbf16, #tpu.memory_space<vmem>>, vector<12x36xbf16>
    %cst = arith.constant dense<0.000000e+00> : vector<12x128xf32>
    %3 = tpu.matmul %2, %1, %cst {dimension_numbers = #tpu.dot_dimension_numbers<[1], [0], [0], [1], [0, 0, 1, 1], [], []>} : vector<12x36xbf16>, vector<36x128xbf16>, vector<12x128xf32> -> vector<12x128xf32>
    %4 = vector.extract_strided_slice %1 {offsets = [16, 0], sizes = [4, 128], strides = [1, 1]} : vector<36x128xbf16> to vector<4x128xbf16>
    %5 = vector.extract_strided_slice %1 {offsets = [20, 0], sizes = [4, 128], strides = [1, 1]} : vector<36x128xbf16> to vector<4x128xbf16>
    %6 = vector.extract_strided_slice %1 {offsets = [28, 0], sizes = [4, 128], strides = [1, 1]} : vector<36x128xbf16> to vector<4x128xbf16>
    %7 = vector.extract_strided_slice %1 {offsets = [32, 0], sizes = [4, 128], strides = [1, 1]} : vector<36x128xbf16> to vector<4x128xbf16>
    %8 = arith.maximumf %4, %5 : vector<4x128xbf16>
    %9 = arith.maximumf %6, %7 : vector<4x128xbf16>
    %10 = arith.maximumf %8, %9 : vector<4x128xbf16>
    %11 = arith.extf %10 : vector<4x128xbf16> to vector<4x128xf32>
    %c0_4 = arith.constant 0 : index
    %c0_5 = arith.constant 0 : index
    %12 = memref.load %arg6[%c0_4, %c0_5] : memref<1x1xf32, #tpu.memory_space<smem>>
    %c0_6 = arith.constant 0 : index
    %c0_7 = arith.constant 0 : index
    %13 = vector.load %arg4[%c0_6, %c0_7] : memref<16x1xf32, #tpu.memory_space<vmem>>, vector<12x1xf32>
    %14 = vector.broadcast %13 : vector<12x1xf32> to vector<12x128xf32>
    %15 = arith.mulf %3, %14 : vector<12x128xf32>
    %c0_8 = arith.constant 0 : index
    %c0_9 = arith.constant 0 : index
    %16 = vector.load %arg5[%c0_8, %c0_9] : memref<16x1xf32, #tpu.memory_space<vmem>>, vector<12x1xf32>
    %17 = vector.broadcast %16 : vector<12x1xf32> to vector<12x128xf32>
    %18 = arith.addf %15, %17 : vector<12x128xf32>
    %cst_10 = arith.constant 0.000000e+00 : f32
    %19 = vector.broadcast %cst_10 : f32 to vector<12x128xf32>
    %20 = arith.cmpf oge, %18, %19 : vector<12x128xf32>
    %21 = vector.broadcast %12 : f32 to vector<12x128xf32>
    %22 = arith.mulf %21, %18 : vector<12x128xf32>
    %23 = arith.select %20, %18, %22 : vector<12x128xi1>, vector<12x128xf32>
    %c0_11 = arith.constant 0 : index
    %c0_12 = arith.constant 0 : index
    %c0_13 = arith.constant 0 : index
    %24 = vector.load %arg7[%c0_11, %c0_12, %c0_13] : memref<1x16x128xf32, #tpu.memory_space<vmem>>, vector<1x12x128xf32>
    %25 = vector.shape_cast %24 : vector<1x12x128xf32> to vector<12x128xf32>
    %26 = vector.shape_cast %23 : vector<12x128xf32> to vector<1x12x128xf32>
    tpu.vector_store %arg7[%c0_11, %c0_12, %c0_13], %26 {strides = array<i32>} : memref<1x16x128xf32, #tpu.memory_space<vmem>>, vector<1x12x128xf32>,
    %c12 = arith.constant 12 : index
    %c0_14 = arith.constant 0 : index
    %27 = vector.load %arg4[%c12, %c0_14] : memref<16x1xf32, #tpu.memory_space<vmem>>, vector<4x1xf32>
    %28 = vector.broadcast %27 : vector<4x1xf32> to vector<4x128xf32>
    %29 = arith.mulf %11, %28 : vector<4x128xf32>
    %c12_15 = arith.constant 12 : index
    %c0_16 = arith.constant 0 : index
    %30 = vector.load %arg5[%c12_15, %c0_16] : memref<16x1xf32, #tpu.memory_space<vmem>>, vector<4x1xf32>
    %31 = vector.broadcast %30 : vector<4x1xf32> to vector<4x128xf32>
    %32 = arith.addf %29, %31 : vector<4x128xf32>
    %cst_17 = arith.constant 0.000000e+00 : f32
    %33 = vector.broadcast %cst_17 : f32 to vector<4x128xf32>
    %34 = arith.cmpf oge, %32, %33 : vector<4x128xf32>
    %35 = vector.broadcast %12 : f32 to vector<4x128xf32>
    %36 = arith.mulf %35, %32 : vector<4x128xf32>
    %37 = arith.select %34, %32, %36 : vector<4x128xi1>, vector<4x128xf32>
    %c0_18 = arith.constant 0 : index
    %c12_19 = arith.constant 12 : index
    %c0_20 = arith.constant 0 : index
    %38 = vector.load %arg7[%c0_18, %c12_19, %c0_20] : memref<1x16x128xf32, #tpu.memory_space<vmem>>, vector<1x4x128xf32>
    %39 = vector.shape_cast %38 : vector<1x4x128xf32> to vector<4x128xf32>
    %40 = vector.shape_cast %37 : vector<4x128xf32> to vector<1x4x128xf32>
    tpu.vector_store %arg7[%c0_18, %c12_19, %c0_20], %40 {strides = array<i32>} : memref<1x16x128xf32, #tpu.memory_space<vmem>>, vector<1x4x128xf32>,
    return
  }
  func.func @transform_0(%arg0: i32, %arg1: i32) -> (i32, i32, i32) {
    %c0_i32 = arith.constant 0 : i32
    %c0_i32_0 = arith.constant 0 : i32
    return %arg0, %c0_i32, %arg1 : i32, i32, i32
  }
  func.func @transform_1(%arg0: i32, %arg1: i32) -> (i32, i32) {
    %c0_i32 = arith.constant 0 : i32
    %c0_i32_0 = arith.constant 0 : i32
    %c0_i32_1 = arith.constant 0 : i32
    return %c0_i32, %c0_i32_0 : i32, i32
  }
  func.func @transform_2(%arg0: i32, %arg1: i32) -> (i32, i32) {
    %c0_i32 = arith.constant 0 : i32
    %c0_i32_0 = arith.constant 0 : i32
    %c0_i32_1 = arith.constant 0 : i32
    return %c0_i32, %c0_i32_0 : i32, i32
  }
  func.func @transform_3(%arg0: i32, %arg1: i32) -> (i32, i32) {
    %c0_i32 = arith.constant 0 : i32
    %c0_i32_0 = arith.constant 0 : i32
    %c0_i32_1 = arith.constant 0 : i32
    return %c0_i32, %c0_i32_0 : i32, i32
  }
  func.func @transform_4(%arg0: i32, %arg1: i32) -> (i32, i32) {
    %c0_i32 = arith.constant 0 : i32
    %c0_i32_0 = arith.constant 0 : i32
    %c0_i32_1 = arith.constant 0 : i32
    return %c0_i32, %c0_i32_0 : i32, i32
  }
  func.func @transform_5(%arg0: i32, %arg1: i32) -> (i32, i32, i32) {
    %c0_i32 = arith.constant 0 : i32
    %c0_i32_0 = arith.constant 0 : i32
    return %arg0, %c0_i32, %arg1 : i32, i32, i32
  }
}

</mosaic_0001>

<llo_original>
// kernel: tpu_custom_call.1
$region0: #{tpu_custom_call.1}
  #allocation0 [shape = 'u32[]', space=smem, size = 0x4, offset = 0x4, fixed_abs, tag = 'smem constant byte address 0x4 - core index']
  #allocation1 [shape = 'u32[144,128]{1,0:T(1,128)}', space=vmem, size = 0x12000, scoped, tag = 'internal scratch']
  #allocation2 [shape = 'f32[1,1]{1,0:T(1,128)S(6)}', space=smem, size = 0x200, scoped, tag = 'scoped memory for tpu_custom_call.1']
  %s0 = inlined_call_operand.vmem [shape: bf16[2,36,128], index: 0, kind: input, shape index: {}]
  %s1 = inlined_call_operand.vmem [shape: bf16[12,36], index: 1, kind: input, shape index: {}]
  %s2 = inlined_call_operand.vmem [shape: f32[16,1], index: 2, kind: input, shape index: {}]
  %s3 = inlined_call_operand.vmem [shape: f32[16,1], index: 3, kind: input, shape index: {}]
  %s4 = inlined_call_operand.<no memory space> [shape: f32[1,1], index: 4, kind: input, shape index: {}]
  %s5 = inlined_call_operand.hbm [shape: f32[2,16,128], index: 5, kind: output, shape index: {}]
  %s6 = sld [smem:[#allocation0]]
  $region53: #{tpu_custom_call.1} parent=0
    _
  %s8 = ssub.s32 1, %s6
  %s9 = scalar_select 0, %s8, %s6
  %10 = sst [smem:[#allocation2]] %s4
  $region1: #{tpu_custom_call.1} parent=0
    #allocation3 [shape = 'u8[16384]{0}', space=vmem, size = 0x4000, scoped, tag = 'output window, operand 0']
    #allocation4 [shape = 's32[2]{0}', space=sflag, size = 0x8, scoped, tag = 'scoped memory for tpu_custom_call.1']
    %11 = vsyncpa [#allocation4], 0
    %s12 = scalar_lea.sflag [#allocation4], 1
    %13 = vsyncpa %s12, 0
    loop: start=0, step=1, limit=4
    $region2: #{tpu_custom_call.1} parent=1 // loop_pre_header
      _
    $region3: #{tpu_custom_call.1} parent=1 // loop_header
      %s15 = sphi 0, %s19
      %p16 = scmp.ge.s32.totalorder %s15, 4
      %s22 = sphi 0, %s34
      %s23 = sphi 0, %s30
      %s24 = sphi 0, %s22
      %s25 = sphi 0, %s23
      %s26 = sphi 0, %s24
      %s27 = sphi 0, %s25
      %s39 = sphi 0, %s41
      %s42 = sphi 0, %s39
      %s43 = sphi 0, %s42
      %s59 = sphi 0, %s43
      %s63 = sphi 0, %s63
      %s65 = sphi 0, %s63
      %s66 = sphi 0, %s65
      %s80 = sphi 0, %s66
      %s84 = sphi 0, %s84
      %s86 = sphi 0, %s84
      %s87 = sphi 0, %s86
      %s101 = sphi 0, %s87
      %s105 = sphi 0, %s105
      %s107 = sphi 0, %s105
      %s108 = sphi 0, %s107
      %s122 = sphi 0, %s108
      %s126 = sphi 0, %s126
      %s128 = sphi 0, %s126
      %s129 = sphi 0, %s128
      %s143 = sphi 0, %s129
      %s151 = sphi 0, %s153
      %s154 = sphi 0, %s151
      %s155 = sphi 0, %s154
      %s171 = sphi 0, %s155
    $region4: #{tpu_custom_call.1} parent=1 // loop_header_branch
      %18 = sbr.rel (%p16) target = $region8
    $region5: #{tpu_custom_call.1} parent=1 // loop_body
      %s20 = ssub.s32 %s15, 1
      %s21 = ssub.s32 %s15, 2
      %s28 = sadd.s32 1, %s23
      %p29 = scmp.ge.s32.totalorder %s28, 1
      %s30 = scalar_select %p29, 0, %s28
      %s31 = sadd.s32 1, %s22
      %s32 = scalar_select %p29, %s31, %s22
      %p33 = scmp.ge.s32.totalorder %s32, 2
      %s34 = scalar_select %p33, 0, %s32
      %s35 = ssub.s32 %s22, %s34
      %s36 = ssub.s32 %s23, %s30
      %s37 = sor.u32 %s35, %s36
      %p38 = scmp.eq.s32.totalorder %s37, 0
      %s40 = sadd.s32 %s39, 1
      %s41 = scalar_select %p38, %s39, %s40
      %p44 = pneg %p38
      %p45 = scmp.eq.s32.totalorder %s15, 1
      %p46 = por %p44, %p45
      %p47 = scmp.ne.s32.totalorder %s39, %s42
      %p48 = scmp.eq.s32.totalorder %s15, 0
      %p49 = por %p47, %p48
      %p50 = scmp.ne.s32.totalorder %s39, %s42
      %p51 = scmp.eq.s32.totalorder %s20, 1
      %p52 = por %p50, %p51
      %p53 = scmp.ne.s32.totalorder %s42, %s43
      %p54 = scmp.eq.s32.totalorder %s20, 0
      %p55 = por %p53, %p54
      %p56 = scmp.ne.s32.totalorder %s42, %s43
      %p57 = scmp.eq.s32.totalorder %s21, 1
      %p58 = por %p56, %p57
      %p60 = scmp.ne.s32.totalorder %s43, %s59
      %p61 = scmp.eq.s32.totalorder %s21, 0
      %p62 = por %p60, %p61
      %s64 = sadd.s32 %s63, 1
      %p67 = scmp.eq.s32.totalorder %s15, 1
      %p68 = scmp.ne.s32.totalorder %s63, %s65
      %p69 = scmp.eq.s32.totalorder %s15, 0
      %p70 = por %p68, %p69
      %p71 = scmp.ne.s32.totalorder %s63, %s65
      %p72 = scmp.eq.s32.totalorder %s20, 1
      %p73 = por %p71, %p72
      %p74 = scmp.ne.s32.totalorder %s65, %s66
      %p75 = scmp.eq.s32.totalorder %s20, 0
      %p76 = por %p74, %p75
      %p77 = scmp.ne.s32.totalorder %s65, %s66
      %p78 = scmp.eq.s32.totalorder %s21, 1
      %p79 = por %p77, %p78
      %p81 = scmp.ne.s32.totalorder %s66, %s80
      %p82 = scmp.eq.s32.totalorder %s21, 0
      %p83 = por %p81, %p82
      %s85 = sadd.s32 %s84, 1
      %p88 = scmp.eq.s32.totalorder %s15, 1
      %p89 = scmp.ne.s32.totalorder %s84, %s86
      %p90 = scmp.eq.s32.totalorder %s15, 0
      %p91 = por %p89, %p90
      %p92 = scmp.ne.s32.totalorder %s84, %s86
      %p93 = scmp.eq.s32.totalorder %s20, 1
      %p94 = por %p92, %p93
      %p95 = scmp.ne.s32.totalorder %s86, %s87
      %p96 = scmp.eq.s32.totalorder %s20, 0
      %p97 = por %p95, %p96
      %p98 = scmp.ne.s32.totalorder %s86, %s87
      %p99 = scmp.eq.s32.totalorder %s21, 1
      %p100 = por %p98, %p99
      %p102 = scmp.ne.s32.totalorder %s87, %s101
      %p103 = scmp.eq.s32.totalorder %s21, 0
      %p104 = por %p102, %p103
      %s106 = sadd.s32 %s105, 1
      %p109 = scmp.eq.s32.totalorder %s15, 1
      %p110 = scmp.ne.s32.totalorder %s105, %s107
      %p111 = scmp.eq.s32.totalorder %s15, 0
      %p112 = por %p110, %p111
      %p113 = scmp.ne.s32.totalorder %s105, %s107
      %p114 = scmp.eq.s32.totalorder %s20, 1
      %p115 = por %p113, %p114
      %p116 = scmp.ne.s32.totalorder %s107, %s108
      %p117 = scmp.eq.s32.totalorder %s20, 0
      %p118 = por %p116, %p117
      %p119 = scmp.ne.s32.totalorder %s107, %s108
      %p120 = scmp.eq.s32.totalorder %s21, 1
      %p121 = por %p119, %p120
      %p123 = scmp.ne.s32.totalorder %s108, %s122
      %p124 = scmp.eq.s32.totalorder %s21, 0
      %p125 = por %p123, %p124
      %s127 = sadd.s32 %s126, 1
      %p130 = scmp.eq.s32.totalorder %s15, 1
      %p131 = scmp.ne.s32.totalorder %s126, %s128
      %p132 = scmp.eq.s32.totalorder %s15, 0
      %p133 = por %p131, %p132
      %p134 = scmp.ne.s32.totalorder %s126, %s128
      %p135 = scmp.eq.s32.totalorder %s20, 1
      %p136 = por %p134, %p135
      %p137 = scmp.ne.s32.totalorder %s128, %s129
      %p138 = scmp.eq.s32.totalorder %s20, 0
      %p139 = por %p137, %p138
      %p140 = scmp.ne.s32.totalorder %s128, %s129
      %p141 = scmp.eq.s32.totalorder %s21, 1
      %p142 = por %p140, %p141
      %p144 = scmp.ne.s32.totalorder %s129, %s143
      %p145 = scmp.eq.s32.totalorder %s21, 0
      %p146 = por %p144, %p145
      %s147 = ssub.s32 %s22, %s34
      %s148 = ssub.s32 %s23, %s30
      %s149 = sor.u32 %s147, %s148
      %p150 = scmp.eq.s32.totalorder %s149, 0
      %s152 = sadd.s32 %s151, 1
      %s153 = scalar_select %p150, %s151, %s152
      %p156 = pneg %p150
      %p157 = scmp.eq.s32.totalorder %s15, 1
      %p158 = por %p156, %p157
      %p159 = scmp.ne.s32.totalorder %s151, %s154
      %p160 = scmp.eq.s32.totalorder %s15, 0
      %p161 = por %p159, %p160
      %p162 = scmp.ne.s32.totalorder %s151, %s154
      %p163 = scmp.eq.s32.totalorder %s20, 1
      %p164 = por %p162, %p163
      %p165 = scmp.ne.s32.totalorder %s154, %s155
      %p166 = scmp.eq.s32.totalorder %s20, 0
      %p167 = por %p165, %p166
      %p168 = scmp.ne.s32.totalorder %s154, %s155
      %p169 = scmp.eq.s32.totalorder %s21, 1
      %p170 = por %p168, %p169
      %p172 = scmp.ne.s32.totalorder %s155, %s171
      %p173 = scmp.eq.s32.totalorder %s21, 0
      %p174 = por %p172, %p173
      %p175 = scmp.le.s32.totalorder 1, %s15
      %p176 = scmp.lt.s32.totalorder %s15, 3
      %p177 = pnand %p175, %p176
      %p178 = pneg %p177
      // Predicated region
      $region9: #{tpu_custom_call.1} parent=5 // pred_check
        _
      $region10: #{tpu_custom_call.1} parent=5 // pred_check_branch
        %180 = sbr.rel (%p177) target = $region12
      $region11: #{tpu_custom_call.1} parent=5 // pred_region
        %s181 = ssub.s32 %s15, 1
        // Predicated region
        $region13: #{tpu_custom_call.1} parent=11 // pred_check
          %p182 = pneg %p76
        $region14: #{tpu_custom_call.1} parent=11 // pred_check_branch
          %184 = sbr.rel (%p182) target = $region16
        $region15: #{tpu_custom_call.1} parent=11 // pred_region
          _
        $region16: #{tpu_custom_call.1} parent=11 // pred_fallthru
          _
        // Predicated region
        $region17: #{tpu_custom_call.1} parent=11 // pred_check
          %p185 = pneg %p97
        $region18: #{tpu_custom_call.1} parent=11 // pred_check_branch
          %187 = sbr.rel (%p185) target = $region20
        $region19: #{tpu_custom_call.1} parent=11 // pred_region
          _
        $region20: #{tpu_custom_call.1} parent=11 // pred_fallthru
          _
        // Predicated region
        $region21: #{tpu_custom_call.1} parent=11 // pred_check
          %p188 = pneg %p118
        $region22: #{tpu_custom_call.1} parent=11 // pred_check_branch
          %190 = sbr.rel (%p188) target = $region24
        $region23: #{tpu_custom_call.1} parent=11 // pred_region
          _
        $region24: #{tpu_custom_call.1} parent=11 // pred_fallthru
          _
        // Predicated region
        $region25: #{tpu_custom_call.1} parent=11 // pred_check
          %p191 = pneg %p139
        $region26: #{tpu_custom_call.1} parent=11 // pred_check_branch
          %193 = sbr.rel (%p191) target = $region28
        $region27: #{tpu_custom_call.1} parent=11 // pred_region
          _
        $region28: #{tpu_custom_call.1} parent=11 // pred_fallthru
          _
      $region12: #{tpu_custom_call.1} parent=5 // pred_fallthru
        _
      %p194 = scmp.lt.s32.totalorder %s15, 2
      // Predicated region
      $region29: #{tpu_custom_call.1} parent=5 // pred_check
        %p195 = pneg %p194
      $region30: #{tpu_custom_call.1} parent=5 // pred_check_branch
        %197 = sbr.rel (%p195) target = $region32
      $region31: #{tpu_custom_call.1} parent=5 // pred_region
        // Predicated region
        $region33: #{tpu_custom_call.1} parent=31 // pred_check
          %p198 = pneg %p49
        $region34: #{tpu_custom_call.1} parent=31 // pred_check_branch
          %200 = sbr.rel (%p198) target = $region36
        $region35: #{tpu_custom_call.1} parent=31 // pred_region
          %p201 = scmp.lt.s32.totalorder %s22, 1
          %s202 = scalar_select %p201, %s22, 1
          %p203 = scmp.lt.s32.totalorder %s23, 0
          %s204 = scalar_select %p203, %s23, 0
          %s205 = smul.addr %s202, 5
          %s206 = sadd.s32 %s204, %s205
          %s207 = smul.addr %s206, 4
          %s208 = scalar_lea.vmem %s0, %s207
        $region36: #{tpu_custom_call.1} parent=31 // pred_fallthru
          _
      $region32: #{tpu_custom_call.1} parent=5 // pred_fallthru
        _
      %p209 = scmp.le.s32.totalorder 1, %s15
      %p210 = scmp.lt.s32.totalorder %s15, 3
      %p211 = pnand %p209, %p210
      %p212 = pneg %p211
      // Predicated region
      $region37: #{tpu_custom_call.1} parent=5 // pred_check
        _
      $region38: #{tpu_custom_call.1} parent=5 // pred_check_branch
        %214 = sbr.rel (%p211) target = $region40
      $region39: #{tpu_custom_call.1} parent=5 // pred_region
        %s215 = ssub.s32 %s15, 1
        %p216 = scmp.lt.s32.totalorder %s24, 1
        %s217 = scalar_select %p216, %s24, 1
        %p218 = scmp.lt.s32.totalorder %s25, 0
        %s219 = scalar_select %p218, %s25, 0
        %s220 = smul.addr %s217, 5
        %s221 = sadd.s32 %s219, %s220
        %s222 = smul.addr %s221, 4
        %s223 = scalar_lea.vmem %s0, %s222
        %p224 = pneg %p55
        %p225 = pneg %p52
        %p226 = pneg %p76
        %p227 = pneg %p73
        %p228 = pneg %p97
        %p229 = pneg %p94
        %p230 = pneg %p118
        %p231 = pneg %p115
        %p232 = pneg %p139
        %p233 = pneg %p136
        %p234 = pneg %p167
        %p235 = pneg %p164
        %s236 = sand.u32 %s154, 1
        %s237 = scalar_lea.sflag [#allocation4], %s236
        %s238 = sand.u32 %s154, 1
        %s239 = smul.addr %s238, 16
        %s240 = scalar_lea.vmem [#allocation3], %s239
        %p241 = scmp.lt.s32.totalorder %s24, 1
        %s242 = scalar_select %p241, %s24, 1
        %p243 = scmp.lt.s32.totalorder %s25, 0
        %s244 = scalar_select %p243, %s25, 0
        %s245 = smul.addr %s242, 5
        %s246 = sadd.s32 %s244, %s245
        %s247 = smul.addr %s246, 4
        %s248 = scalar_lea.vmem %s0, %s247
        %v250 = vld [vmem:[%s248] sm:$0xf]
        %v251 = vld [vmem:[%s248 + $0x4] sm:$0xf]
        %v252 = vld [vmem:[%s248 + $0x8] sm:$0xf]
        %v253 = vld [vmem:[%s248 + $0xc] sm:$0xf]
        %v254 = vld [vmem:[%s248 + $0x10] sm:$0x3]
        %v255 = vld [vmem:[%s1] sm:$0xf]
        %v256 = vld [vmem:[%s1 + $0x4] sm:$0x3]
        %v259 = vunpack.c.l.b16 %v255
        %v260 = vunpack.c.l.b16 %v256
        %v261 = vpack.c.b16 %v260, %v259
        %v267 = vunpack.c.l.b16 %v250
        %v268 = vunpack.c.l.b16 %v251
        %v269 = vunpack.c.l.b16 %v252
        %v270 = vunpack.c.l.b16 %v253
        %v271 = vunpack.c.l.b16 %v254
        %v272 = vpack.c.b16 %v268, %v267
        %v273 = vpack.c.b16 %v270, %v269
        %v274 = vpack.c.b16 %v271, %v271
        %vm277 = vcmask 293888
        %v279 = vsel %vm277, %v261, 0
        %vm281 = vcmask 1041408
        %v283 = vsel %vm281, %v274, 0
        %285 = vmatprep.subr.bf16.mxu0 0
        %286 = vmatpush1.bf16.msra.mxu0 %v272
        %287 = vmatprep.subr.bf16.mxu0 0
        %288 = vmatpush1.bf16.msra.mxu0 %v273
        %289 = vmatprep.subr.bf16.mxu0 0
        %290 = vmatpush1.bf16.msra.mxu0 %v283
        %291 = vmatprep.subr.bf16.mxu0 0
        %292 = vmatpush1.bf16.msra.mxu0 0
        %293 = vmatprep.subr.bf16.mxu0 0
        %294 = vmatpush1.bf16.msra.mxu0 0
        %295 = vmatprep.subr.bf16.mxu0 0
        %296 = vmatpush1.bf16.msra.mxu0 0
        %297 = vmatprep.subr.bf16.mxu0 0
        %298 = vmatpush1.bf16.msra.mxu0 0
        %299 = vmatprep.subr.bf16.mxu0 0
        %300 = vmatpush1.bf16.msra.mxu0 0
        %301 = vmatprep.subr.bf16.mxu0 0
        %302 = vmatpush1.bf16.msra.mxu0 0
        %303 = vmatprep.subr.bf16.mxu0 0
        %304 = vmatpush1.bf16.msra.mxu0 0
        %305 = vmatprep.subr.bf16.mxu0 0
        %306 = vmatpush1.bf16.msra.mxu0 0
        %307 = vmatprep.subr.bf16.mxu0 0
        %308 = vmatpush1.bf16.msra.mxu0 0
        %309 = vmatprep.subr.bf16.mxu0 0
        %310 = vmatpush1.bf16.msra.mxu0 0
        %311 = vmatprep.subr.bf16.mxu0 0
        %312 = vmatpush1.bf16.msra.mxu0 0
        %313 = vmatprep.subr.bf16.mxu0 0
        %314 = vmatpush1.bf16.msra.mxu0 0
        %315 = vmatprep.subr.bf16.mxu0 0
        %316 = vmatpush1.bf16.msra.mxu0 0
        %317 = vmatprep.mubr.bf16.mxu0 0
        %318 = vmatmul.mubr.bf16.gmra.mrb[0].mxu0 %v279
        %v319 = vpop.f32.mrb[0].mxu0
        %v320 = vadd.f32 0.0, %v319
        %v321 = vpop.f32.mrb[0].mxu0
        %v322 = vpop.f32.mrb[0].mxu0
        %v323 = vadd.f32 0.0, %v322
        %v324 = vpop.f32.mrb[0].mxu0
        %325 = vdwg.mxu0
        %v326 = vrot.slane %v252, 6
        %v327 = vrot.slane %v326, 4
        %v329 = vmax.bf16 %v252, %v327
        %v330 = vrot.slane %v254, 6
        %v332 = vmax.bf16 %v253, %v330
        %v334 = vrot.slane %v332, 6
        %v335 = vrot.slane %v334, 4
        %v337 = vmax.bf16 %v329, %v335
        %v338 = vunpack.c.l.bf16 %v337
        %s339 = sld [smem:[#allocation2]]
        %v340 = vld [vmem:[%s2] sm:$0xff]
        %v341 = vld [vmem:[%s2 + $0x8] sm:$0xf]
        %343 = vset.pattern.permute.xlu0 0
        %344 = vperm.xlu0 %343, %v340
        %v345 = vpop.permute.xlu0 %344
        %348 = vset.pattern.permute.xlu0 0
        %349 = vperm.xlu0 %348, %v341
        %v350 = vpop.permute.xlu0 %349
        %v352 = vmul.f32 %v320, %v345
        %v353 = vmul.f32 %v323, %v350
        %v354 = vld [vmem:[%s3] sm:$0xff]
        %v355 = vld [vmem:[%s3 + $0x8] sm:$0xf]
        %357 = vset.pattern.permute.xlu0 0
        %358 = vperm.xlu0 %357, %v354
        %v359 = vpop.permute.xlu0 %358
        %362 = vset.pattern.permute.xlu0 0
        %363 = vperm.xlu0 %362, %v355
        %v364 = vpop.permute.xlu0 %363
        %v366 = vadd.f32 %v352, %v359
        %v367 = vadd.f32 %v353, %v364
        %vm368 = vcmp.ge.f32.partialorder %v366, 0.0
        %vm369 = vcmp.ge.f32.partialorder %v367, 0.0
        %v370 = vstv %s339
        %v371 = vmul.f32 %v370, %v366
        %v372 = vmul.f32 %v370, %v367
        %v373 = vsel %vm368, %v366, %v371
        %v374 = vsel %vm369, %v367, %v372
        %375 = vst [vmem:[%s240] sm:$0xff] %v373
        %376 = vst [vmem:[%s240 + $0x8] sm:$0xf] %v374
        %v377 = vld [vmem:[%s2 + $0xc] sm:$0xf]
        %379 = vset.pattern.permute.xlu0 0
        %380 = vperm.xlu0 %379, %v377
        %v381 = vpop.permute.xlu0 %380
        %v383 = vmul.f32 %v338, %v381
        %v384 = vld [vmem:[%s3 + $0xc] sm:$0xf]
        %386 = vset.pattern.permute.xlu0 0
        %387 = vperm.xlu0 %386, %v384
        %v388 = vpop.permute.xlu0 %387
        %v390 = vadd.f32 %v383, %v388
        %vm391 = vcmp.ge.f32.partialorder %v390, 0.0
        %v392 = vmul.f32 %v370, %v390
        %v393 = vsel %vm391, %v390, %v392
        %394 = vst [vmem:[%s240 + $0xc] sm:$0xf] %v393
        %s395 = sand.u32 %s154, 1
        %s396 = scalar_lea.sflag [#allocation4], %s395
        %s397 = sand.u32 %s154, 1
        %s398 = smul.addr %s397, 16
        %s399 = scalar_lea.vmem [#allocation3], %s398
        // Predicated region
        $region41: #{tpu_custom_call.1} parent=39 // pred_check
          %p400 = pneg %p164
        $region42: #{tpu_custom_call.1} parent=39 // pred_check_branch
          %402 = sbr.rel (%p400) target = $region44
        $region43: #{tpu_custom_call.1} parent=39 // pred_region
          %s404 = ssub.s32 256, 256
          %405 = vsyncadd %s396, %s404
          %s406 = smul.addr %s24, 2
          %s407 = sadd.s32 %s25, %s406
          %s408 = smul.addr %s407, 128
          %s409 = scalar_lea.hbm %s5, %s408
          %s410 = sshll.u32 %s399, 4
          %s411 = int_to_ptr.vmem [resolvable:$true] %s410
          %416 = dma.vmem_to_hbm [thread:$0]  %s411, 256, %s409, %s396, 128, 128, 8
        $region44: #{tpu_custom_call.1} parent=39 // pred_fallthru
          _
      $region40: #{tpu_custom_call.1} parent=5 // pred_fallthru
        _
      %p417 = scmp.le.s32.totalorder 2, %s15
      // Predicated region
      $region45: #{tpu_custom_call.1} parent=5 // pred_check
        %p418 = pneg %p417
      $region46: #{tpu_custom_call.1} parent=5 // pred_check_branch
        %420 = sbr.rel (%p418) target = $region48
      $region47: #{tpu_custom_call.1} parent=5 // pred_region
        %s421 = ssub.s32 %s15, 2
        // Predicated region
        $region49: #{tpu_custom_call.1} parent=47 // pred_check
          %p422 = pneg %p170
        $region50: #{tpu_custom_call.1} parent=47 // pred_check_branch
          %424 = sbr.rel (%p422) target = $region52
        $region51: #{tpu_custom_call.1} parent=47 // pred_region
          %s425 = sand.u32 %s155, 1
          %s426 = scalar_lea.sflag [#allocation4], %s425
          %s427 = sand.u32 %s155, 1
          %s428 = smul.addr %s427, 16
          %s429 = scalar_lea.vmem [#allocation3], %s428
          %430 = dma.done %s426, 256
        $region52: #{tpu_custom_call.1} parent=47 // pred_fallthru
          _
      $region48: #{tpu_custom_call.1} parent=5 // pred_fallthru
        _
    $region6: #{tpu_custom_call.1} parent=1 // loop_footer
      %s19 = sadd.s32 1, %s15
    $region7: #{tpu_custom_call.1} parent=1 // loop_footer_branch
      %14 = sbr.rel target = $region3
    $region8: #{tpu_custom_call.1} parent=1 // loop_exit
      _
    %431 = vsyncpa [#allocation4], 1
    %s432 = scalar_lea.sflag [#allocation4], 1
    %433 = vsyncpa %s432, 1

</llo_original>
